<compile_context>
chip_gen: v7x
topology: tpu7x:2x2x1
jax: 0.10.0
libtpu: 0.0.40
codegen_flags: <defaults>
</compile_context>

<pallas_src>
import functools

import jax
import jax.numpy as jnp
from jax import lax
from jax.experimental import pallas as pl
from jax.experimental.pallas import tpu as pltpu


def _round_up(x, m):
    return ((x + m - 1) // m) * m


def _next_pow2(x):
    p = 1
    while p < x:
        p *= 2
    return p


def _choose_tile_rows(m_rows, logit_itemsize):
    # Padding-aware VMEM budget: double-buffered logits + one-hot blocks plus
    # ~8 live (R, 128) f32 temporaries in the body.  ~36 MiB keeps the largest
    # tile comfortably inside a 48 MiB scoped limit (v7x physical = 64 MiB).
    budget = 36 * 1024 * 1024
    per_row = 2 * 128 * (logit_itemsize + 1) + 8 * 128 * 4
    r = budget // per_row
    r = max(32, min(8192, (r // 32) * 32))
    return m_rows if r >= m_rows else r


def _sanitize_tile_rows(tile_rows, m_rows):
    tile_rows = int(tile_rows)
    if tile_rows >= m_rows:
        return m_rows
    return min(m_rows, max(32, (tile_rows // 32) * 32))


def _recall_loss_kernel(x_ref, oh_ref, w_ref, out_ref, *, num_rows, c_pad,
                        log2c, threshold):
    # x_ref : (R, 128) logits in the flat sample-major layout
    # oh_ref: (R, 128) int8 one-hot of the target class (same layout)
    # w_ref : (1, 128) per-lane class weight  w[lane % c_pad]
    # out_ref:(1, 4, 128) per-lane partial sums [ce*w, w, tp, pos]
    r = x_ref.shape[0]
    lane = lax.broadcasted_iota(jnp.int32, (1, 128), 1)

    # Tail-tile mask: rows past the true (static) row count hold garbage.
    row = pl.program_id(0) * r + lax.broadcasted_iota(jnp.int32, (r, 1), 0)
    valid = row < num_rows
    x = jnp.where(valid, x_ref[...].astype(jnp.float32), 0.0)      # (R, 128)
    oh = jnp.where(valid, oh_ref[...].astype(jnp.float32), 0.0)    # (R, 128)

    # Segmented per-sample all-reduce over aligned groups of c_pad lanes via a
    # lane butterfly: log2(c_pad) roll pairs (XLU) + selects (VPU).
    def seg_allreduce(v, op):
        for k in range(log2c):
            s = 1 << k
            up = pltpu.roll(v, 128 - s, axis=1)    # value from lane l + s
            dn = pltpu.roll(v, s, axis=1)          # value from lane l - s
            take_up = ((lane >> k) & 1) == 0
            v = op(v, jnp.where(take_up, up, dn))
        return v

    m = seg_allreduce(x, jnp.maximum)              # per-sample max (broadcast)
    z = x - m
    ex = jnp.exp(z)
    se = seg_allreduce(ex, jnp.add)                # per-sample sum(exp) (bcast)
    lse = jnp.log(se)

    wl = w_ref[...]                                # (1, 128)
    ohw = oh * wl                                  # w[target] at the target lane
    is1 = (lane & (c_pad - 1)) == 1                # lane holding the class-1 logit
    pred = ex > threshold * se                     # exact: p1 > thr  <=>  e1 > thr*se

    ce_c = ohw * (lse - z)                         # w[t] * (-log softmax[t])
    tp_c = jnp.where(jnp.logical_and(is1, pred), oh, 0.0)
    pos_c = jnp.where(is1, oh, 0.0)

    # Row-sum each contribution to a lane-dense (1, 128) partial; stack into
    # sublanes 0..3 of the output block.  The single cross-lane reduction
    # happens once, in the JAX epilogue.
    p_ce = jnp.sum(ce_c, axis=0, keepdims=True)
    p_w = jnp.sum(ohw, axis=0, keepdims=True)
    p_tp = jnp.sum(tp_c, axis=0, keepdims=True)
    p_pos = jnp.sum(pos_c, axis=0, keepdims=True)
    ridx = lax.broadcasted_iota(jnp.int32, (4, 128), 0)
    stacked = (jnp.where(ridx == 0, p_ce, 0.0)
               + jnp.where(ridx == 1, p_w, 0.0)
               + jnp.where(ridx == 2, p_tp, 0.0)
               + jnp.where(ridx == 3, p_pos, 0.0))
    out_ref[...] = stacked.reshape(1, 4, 128)


def recall_loss(inputs, targets, class_weights=None, beta=2.0, threshold=0.15,
                tile_rows=None):
    """inputs: (N, C) float logits; targets: (N,) int class indices."""
    n, c = inputs.shape
    if c < 2:
        raise ValueError("RecallLoss needs >= 2 classes (class 1 is positive).")
    if c > 128:
        # TODO(synk): class segments wider than one 128-lane vreg row are not
        # supported by the lane-butterfly reduction.
        raise ValueError("recall_loss supports at most 128 classes.")

    if class_weights is None:
        w = jnp.ones((c,), dtype=jnp.float32)
    else:
        w = jnp.asarray(class_weights, dtype=jnp.float32).reshape(c)

    # Classes must tile a 128-lane row; class counts that are not powers of
    # two get padded with a very negative logit / zero weight (one copy pass,
    # only for such C).
    c_pad = _next_pow2(c)
    x = inputs
    if c_pad != c:
        x = jnp.pad(x, ((0, 0), (0, c_pad - c)), constant_values=-1e30)
        w_pad = jnp.concatenate([w, jnp.zeros((c_pad - c,), jnp.float32)])
    else:
        w_pad = w

    # int8 one-hot target stream in the same flat layout as the logits.
    # Out-of-range targets -> all-zero row -> zero weight / zero contribution.
    # TODO(synk): F.cross_entropy raises on out-of-range targets; no in-kernel
    # error path here.
    oh = jax.nn.one_hot(targets, c_pad, dtype=jnp.int8)

    # Bitcast-equivalent reshapes onto a lane-dense (M, 128) layout.  Only when
    # N*c_pad is not a multiple of 128 do we pay a small flat-pad copy.
    n_flat = n * c_pad
    x_flat = x.reshape(n_flat)
    oh_flat = oh.reshape(n_flat)
    pad = _round_up(n_flat, 128) - n_flat
    if pad:
        x_flat = jnp.pad(x_flat, (0, pad))
        oh_flat = jnp.pad(oh_flat, (0, pad))
    m_rows = (n_flat + pad) // 128
    x2 = x_flat.reshape(m_rows, 128)
    oh2 = oh_flat.reshape(m_rows, 128)
    w_lane = jnp.tile(w_pad, 128 // c_pad).reshape(1, 128)

    itemsize = jnp.dtype(inputs.dtype).itemsize
    if tile_rows is None:
        tile_rows = _choose_tile_rows(m_rows, itemsize)
    else:
        tile_rows = _sanitize_tile_rows(tile_rows, m_rows)
    num_tiles = pl.cdiv(m_rows, tile_rows)

    log2c = c_pad.bit_length() - 1
    kernel = functools.partial(
        _recall_loss_kernel, num_rows=m_rows, c_pad=c_pad, log2c=log2c,
        threshold=float(threshold))

    n_elems = m_rows * 128
    cost = pl.CostEstimate(
        flops=int(n_elems * (10 + 4 * log2c)),
        transcendentals=int(2 * n_elems),
        bytes_accessed=int(n_elems * (itemsize + 1)
                           + num_tiles * 4 * 128 * 4 + 512),
    )

    partials = pl.pallas_call(
        kernel,
        out_shape=jax.ShapeDtypeStruct((num_tiles, 4, 128), jnp.float32),
        grid=(num_tiles,),
        in_specs=[
            pl.BlockSpec((tile_rows, 128), lambda i: (i, 0)),   # logits
            pl.BlockSpec((tile_rows, 128), lambda i: (i, 0)),   # one-hot int8
            pl.BlockSpec((1, 128), lambda i: (0, 0)),           # lane weights
        ],
        out_specs=pl.BlockSpec((1, 4, 128), lambda i: (i, 0, 0)),
        compiler_params=pltpu.CompilerParams(
            dimension_semantics=("parallel",),
            vmem_limit_bytes=48 * 1024 * 1024,
        ),
        cost_estimate=cost,
    )(x2, oh2, w_lane)

    totals = jnp.sum(partials, axis=(0, 2))          # (4,)
    ce = totals[0] / totals[1]
    recall = totals[2] / (totals[3] + 1e-6)           # tp / (tp + fn + 1e-6)
    return ce + beta * (1.0 - recall)


def recall_loss_ref(inputs, targets, class_weights=None, beta=2.0,
                    threshold=0.15):
    """Pure-JAX reference mirroring the PyTorch module."""
    n, c = inputs.shape
    if class_weights is None:
        w = jnp.ones((c,), dtype=jnp.float32)
    else:
        w = jnp.asarray(class_weights, dtype=jnp.float32)
    x = inputs.astype(jnp.float32)
    logp = jax.nn.log_softmax(x, axis=1)
    probs = jax.nn.softmax(x, axis=1)
    ce_per = -logp[jnp.arange(n), targets]
    w_per = w[targets]
    ce = jnp.sum(ce_per * w_per) / jnp.sum(w_per)
    pred_pos = probs[:, 1] > threshold
    is_pos = targets == 1
    tp = jnp.sum((pred_pos & is_pos).astype(jnp.float32))
    fn = jnp.sum(((~pred_pos) & is_pos).astype(jnp.float32))
    recall = tp / (tp + fn + 1e-6)
    return ce + beta * (1.0 - recall)


if __name__ == "__main__":
    key = jax.random.PRNGKey(0)
    k1, k2, k3, k4, k5, k6, k7, k8 = jax.random.split(key, 8)

    # Case 1: weighted, N a multiple of 128/C -> fully copy-free path
    # (bitcast reshapes only), single tile.
    N1, C = 256, 4
    x1 = jax.random.normal(k1, (N1, C), dtype=jnp.float32)
    t1 = jax.random.randint(k2, (N1,), 0, C, dtype=jnp.int32)
    cw = jnp.array([1.0, 2.0, 0.5, 1.5], dtype=jnp.float32)
    out1 = jax.block_until_ready(recall_loss(x1, t1, class_weights=cw))
    ref1 = recall_loss_ref(x1, t1, class_weights=cw)
    assert jnp.allclose(out1, ref1, atol=1e-5, rtol=1e-5), (out1, ref1)

    # Case 2: unweighted, N*C not a multiple of 128 (small flat pad copy).
    N2 = 300
    x2 = jax.random.normal(k3, (N2, C), dtype=jnp.float32)
    t2 = jax.random.randint(k4, (N2,), 0, C, dtype=jnp.int32)
    out2 = jax.block_until_ready(recall_loss(x2, t2))
    ref2 = recall_loss_ref(x2, t2)
    assert jnp.allclose(out2, ref2, atol=1e-5, rtol=1e-5), (out2, ref2)

    # Case 3: bf16 logits kept bf16 through HBM, forced small tile ->
    # multi-tile grid with in-kernel tail-row masking (m_rows=41, tile=32).
    N3 = 1300
    x3 = jax.random.normal(k5, (N3, C), dtype=jnp.float32).astype(jnp.bfloat16)
    t3 = jax.random.randint(k6, (N3,), 0, C, dtype=jnp.int32)
    out3 = jax.block_until_ready(
        recall_loss(x3, t3, class_weights=cw, tile_rows=32))
    ref3 = recall_loss_ref(x3, t3, class_weights=cw)
    assert jnp.allclose(out3, ref3, atol=1e-4, rtol=1e-4), (out3, ref3)

    # Case 4: class count that does not divide 128 (C=3 -> padded to 4).
    N4, C4 = 320, 3
    x4 = jax.random.normal(k7, (N4, C4), dtype=jnp.float32)
    t4 = jax.random.randint(k8, (N4,), 0, C4, dtype=jnp.int32)
    cw4 = jnp.array([1.0, 0.7, 1.3], dtype=jnp.float32)
    out4 = jax.block_until_ready(recall_loss(x4, t4, class_weights=cw4))
    ref4 = recall_loss_ref(x4, t4, class_weights=cw4)
    assert jnp.allclose(out4, ref4, atol=1e-5, rtol=1e-5), (out4, ref4)

    print("KERNEL_OK")
</pallas_src>

<mosaic_0001>
module attributes {stable_mosaic.version = 11 : i64} {
  func.func @_recall_loss_kernel(%arg0: i32, %arg1: memref<8x128xf32, #tpu.memory_space<vmem>>, %arg2: memref<8x128xi8, #tpu.memory_space<vmem>>, %arg3: memref<1x128xf32, #tpu.memory_space<vmem>>, %arg4: memref<1x4x128xf32, #tpu.memory_space<vmem>>) attributes {dimension_semantics = [#tpu.dimension_semantics<parallel>], iteration_bounds = array<i64: 1>, scalar_prefetch = 0 : i64, scratch_operands = 0 : i64, tpu.core_type = #tpu.core_type<tc>, window_params = [{transform_indices = @transform_0, window_bounds = array<i64: 8, 128>}, {transform_indices = @transform_1, window_bounds = array<i64: 8, 128>}, {pipeline_mode = #tpu.pipeline_mode<synchronous>, transform_indices = @transform_2, window_bounds = array<i64: 1, 128>}, {transform_indices = @transform_3, window_bounds = array<i64: 1, 4, 128>}]} {
    %0 = tpu.iota {dimensions = array<i32: 1>} : vector<1x128xi32>
    %c8_i32 = arith.constant 8 : i32
    %1 = arith.muli %arg0, %c8_i32 : i32
    %2 = tpu.iota {dimensions = array<i32: 0>} : vector<8x1xi32>
    %3 = vector.broadcast %1 : i32 to vector<8x1xi32>
    %4 = arith.addi %3, %2 : vector<8x1xi32>
    %c8_i32_0 = arith.constant 8 : i32
    %5 = vector.broadcast %c8_i32_0 : i32 to vector<8x1xi32>
    %6 = arith.cmpi slt, %4, %5 : vector<8x1xi32>
    %c0 = arith.constant 0 : index
    %c0_1 = arith.constant 0 : index
    %7 = vector.load %arg1[%c0, %c0_1] : memref<8x128xf32, #tpu.memory_space<vmem>>, vector<8x128xf32>
    %cst = arith.constant 0.000000e+00 : f32
    %8 = vector.shape_cast %6 : vector<8x1xi1> to vector<8x1xi1>
    %9 = vector.broadcast %8 : vector<8x1xi1> to vector<8x128xi1>
    %10 = vector.broadcast %cst : f32 to vector<8x128xf32>
    %11 = arith.select %9, %7, %10 : vector<8x128xi1>, vector<8x128xf32>
    %c0_2 = arith.constant 0 : index
    %c0_3 = arith.constant 0 : index
    %12 = vector.load %arg2[%c0_2, %c0_3] : memref<8x128xi8, #tpu.memory_space<vmem>>, vector<8x128xi8>
    %13 = arith.sitofp %12 : vector<8x128xi8> to vector<8x128xf32>
    %cst_4 = arith.constant 0.000000e+00 : f32
    %14 = vector.shape_cast %6 : vector<8x1xi1> to vector<8x1xi1>
    %15 = vector.broadcast %14 : vector<8x1xi1> to vector<8x128xi1>
    %16 = vector.broadcast %cst_4 : f32 to vector<8x128xf32>
    %17 = arith.select %15, %13, %16 : vector<8x128xi1>, vector<8x128xf32>
    %c127_i32 = arith.constant 127 : i32
    %18 = tpu.dynamic_rotate %11 by %c127_i32 dim 1 : vector<8x128xf32>, i32 -> vector<8x128xf32>
    %c1_i32 = arith.constant 1 : i32
    %19 = tpu.dynamic_rotate %11 by %c1_i32 dim 1 : vector<8x128xf32>, i32 -> vector<8x128xf32>
    %c0_i32 = arith.constant 0 : i32
    %20 = vector.broadcast %c0_i32 : i32 to vector<1x128xi32>
    %21 = arith.shrsi %0, %20 : vector<1x128xi32>
    %c1_i32_5 = arith.constant 1 : i32
    %22 = vector.broadcast %c1_i32_5 : i32 to vector<1x128xi32>
    %23 = arith.andi %21, %22 : vector<1x128xi32>
    %c0_i32_6 = arith.constant 0 : i32
    %24 = vector.broadcast %c0_i32_6 : i32 to vector<1x128xi32>
    %25 = arith.cmpi eq, %23, %24 : vector<1x128xi32>
    %26 = vector.shape_cast %25 : vector<1x128xi1> to vector<1x128xi1>
    %27 = vector.broadcast %26 : vector<1x128xi1> to vector<8x128xi1>
    %28 = arith.select %27, %18, %19 : vector<8x128xi1>, vector<8x128xf32>
    %29 = arith.maximumf %11, %28 : vector<8x128xf32>
    %c126_i32 = arith.constant 126 : i32
    %30 = tpu.dynamic_rotate %29 by %c126_i32 dim 1 : vector<8x128xf32>, i32 -> vector<8x128xf32>
    %c2_i32 = arith.constant 2 : i32
    %31 = tpu.dynamic_rotate %29 by %c2_i32 dim 1 : vector<8x128xf32>, i32 -> vector<8x128xf32>
    %c1_i32_7 = arith.constant 1 : i32
    %32 = vector.broadcast %c1_i32_7 : i32 to vector<1x128xi32>
    %33 = arith.shrsi %0, %32 : vector<1x128xi32>
    %c1_i32_8 = arith.constant 1 : i32
    %34 = vector.broadcast %c1_i32_8 : i32 to vector<1x128xi32>
    %35 = arith.andi %33, %34 : vector<1x128xi32>
    %c0_i32_9 = arith.constant 0 : i32
    %36 = vector.broadcast %c0_i32_9 : i32 to vector<1x128xi32>
    %37 = arith.cmpi eq, %35, %36 : vector<1x128xi32>
    %38 = vector.shape_cast %37 : vector<1x128xi1> to vector<1x128xi1>
    %39 = vector.broadcast %38 : vector<1x128xi1> to vector<8x128xi1>
    %40 = arith.select %39, %30, %31 : vector<8x128xi1>, vector<8x128xf32>
    %41 = arith.maximumf %29, %40 : vector<8x128xf32>
    %42 = arith.subf %11, %41 : vector<8x128xf32>
    %43 = math.exp %42 : vector<8x128xf32>
    %c127_i32_10 = arith.constant 127 : i32
    %44 = tpu.dynamic_rotate %43 by %c127_i32_10 dim 1 : vector<8x128xf32>, i32 -> vector<8x128xf32>
    %c1_i32_11 = arith.constant 1 : i32
    %45 = tpu.dynamic_rotate %43 by %c1_i32_11 dim 1 : vector<8x128xf32>, i32 -> vector<8x128xf32>
    %c0_i32_12 = arith.constant 0 : i32
    %46 = vector.broadcast %c0_i32_12 : i32 to vector<1x128xi32>
    %47 = arith.shrsi %0, %46 : vector<1x128xi32>
    %c1_i32_13 = arith.constant 1 : i32
    %48 = vector.broadcast %c1_i32_13 : i32 to vector<1x128xi32>
    %49 = arith.andi %47, %48 : vector<1x128xi32>
    %c0_i32_14 = arith.constant 0 : i32
    %50 = vector.broadcast %c0_i32_14 : i32 to vector<1x128xi32>
    %51 = arith.cmpi eq, %49, %50 : vector<1x128xi32>
    %52 = vector.shape_cast %51 : vector<1x128xi1> to vector<1x128xi1>
    %53 = vector.broadcast %52 : vector<1x128xi1> to vector<8x128xi1>
    %54 = arith.select %53, %44, %45 : vector<8x128xi1>, vector<8x128xf32>
    %55 = arith.addf %43, %54 : vector<8x128xf32>
    %c126_i32_15 = arith.constant 126 : i32
    %56 = tpu.dynamic_rotate %55 by %c126_i32_15 dim 1 : vector<8x128xf32>, i32 -> vector<8x128xf32>
    %c2_i32_16 = arith.constant 2 : i32
    %57 = tpu.dynamic_rotate %55 by %c2_i32_16 dim 1 : vector<8x128xf32>, i32 -> vector<8x128xf32>
    %c1_i32_17 = arith.constant 1 : i32
    %58 = vector.broadcast %c1_i32_17 : i32 to vector<1x128xi32>
    %59 = arith.shrsi %0, %58 : vector<1x128xi32>
    %c1_i32_18 = arith.constant 1 : i32
    %60 = vector.broadcast %c1_i32_18 : i32 to vector<1x128xi32>
    %61 = arith.andi %59, %60 : vector<1x128xi32>
    %c0_i32_19 = arith.constant 0 : i32
    %62 = vector.broadcast %c0_i32_19 : i32 to vector<1x128xi32>
    %63 = arith.cmpi eq, %61, %62 : vector<1x128xi32>
    %64 = vector.shape_cast %63 : vector<1x128xi1> to vector<1x128xi1>
    %65 = vector.broadcast %64 : vector<1x128xi1> to vector<8x128xi1>
    %66 = arith.select %65, %56, %57 : vector<8x128xi1>, vector<8x128xf32>
    %67 = arith.addf %55, %66 : vector<8x128xf32>
    %68 = math.log %67 : vector<8x128xf32>
    %c0_20 = arith.constant 0 : index
    %c0_21 = arith.constant 0 : index
    %69 = vector.load %arg3[%c0_20, %c0_21] : memref<1x128xf32, #tpu.memory_space<vmem>>, vector<1x128xf32>
    %70 = vector.broadcast %69 : vector<1x128xf32> to vector<8x128xf32>
    %71 = arith.mulf %17, %70 : vector<8x128xf32>
    %c3_i32 = arith.constant 3 : i32
    %72 = vector.broadcast %c3_i32 : i32 to vector<1x128xi32>
    %73 = arith.andi %0, %72 : vector<1x128xi32>
    %c1_i32_22 = arith.constant 1 : i32
    %74 = vector.broadcast %c1_i32_22 : i32 to vector<1x128xi32>
    %75 = arith.cmpi eq, %73, %74 : vector<1x128xi32>
    %cst_23 = arith.constant 1.500000e-01 : f32
    %76 = vector.broadcast %cst_23 : f32 to vector<8x128xf32>
    %77 = arith.mulf %76, %67 : vector<8x128xf32>
    %78 = arith.cmpf ogt, %43, %77 : vector<8x128xf32>
    %79 = arith.subf %68, %42 : vector<8x128xf32>
    %80 = arith.mulf %71, %79 : vector<8x128xf32>
    %81 = vector.broadcast %75 : vector<1x128xi1> to vector<8x128xi1>
    %82 = arith.andi %81, %78 : vector<8x128xi1>
    %cst_24 = arith.constant 0.000000e+00 : f32
    %83 = vector.broadcast %cst_24 : f32 to vector<8x128xf32>
    %84 = arith.select %82, %17, %83 : vector<8x128xi1>, vector<8x128xf32>
    %cst_25 = arith.constant 0.000000e+00 : f32
    %85 = vector.shape_cast %75 : vector<1x128xi1> to vector<1x128xi1>
    %86 = vector.broadcast %85 : vector<1x128xi1> to vector<8x128xi1>
    %87 = vector.broadcast %cst_25 : f32 to vector<8x128xf32>
    %88 = arith.select %86, %17, %87 : vector<8x128xi1>, vector<8x128xf32>
    %cst_26 = arith.constant dense<0.000000e+00> : vector<128xf32>
    %89 = vector.multi_reduction <add>, %80, %cst_26 [0] : vector<8x128xf32> to vector<128xf32>
    %90 = vector.shape_cast %89 : vector<128xf32> to vector<1x128xf32>
    %cst_27 = arith.constant dense<0.000000e+00> : vector<128xf32>
    %91 = vector.multi_reduction <add>, %71, %cst_27 [0] : vector<8x128xf32> to vector<128xf32>
    %92 = vector.shape_cast %91 : vector<128xf32> to vector<1x128xf32>
    %cst_28 = arith.constant dense<0.000000e+00> : vector<128xf32>
    %93 = vector.multi_reduction <add>, %84, %cst_28 [0] : vector<8x128xf32> to vector<128xf32>
    %94 = vector.shape_cast %93 : vector<128xf32> to vector<1x128xf32>
    %cst_29 = arith.constant dense<0.000000e+00> : vector<128xf32>
    %95 = vector.multi_reduction <add>, %88, %cst_29 [0] : vector<8x128xf32> to vector<128xf32>
    %96 = vector.shape_cast %95 : vector<128xf32> to vector<1x128xf32>
    %97 = tpu.iota {dimensions = array<i32: 0>} : vector<4x128xi32>
    %c0_i32_30 = arith.constant 0 : i32
    %98 = vector.broadcast %c0_i32_30 : i32 to vector<4x128xi32>
    %99 = arith.cmpi eq, %97, %98 : vector<4x128xi32>
    %cst_31 = arith.constant 0.000000e+00 : f32
    %100 = vector.shape_cast %90 : vector<1x128xf32> to vector<1x128xf32>
    %101 = vector.broadcast %100 : vector<1x128xf32> to vector<4x128xf32>
    %102 = vector.broadcast %cst_31 : f32 to vector<4x128xf32>
    %103 = arith.select %99, %101, %102 : vector<4x128xi1>, vector<4x128xf32>
    %c1_i32_32 = arith.constant 1 : i32
    %104 = vector.broadcast %c1_i32_32 : i32 to vector<4x128xi32>
    %105 = arith.cmpi eq, %97, %104 : vector<4x128xi32>
    %cst_33 = arith.constant 0.000000e+00 : f32
    %106 = vector.shape_cast %92 : vector<1x128xf32> to vector<1x128xf32>
    %107 = vector.broadcast %106 : vector<1x128xf32> to vector<4x128xf32>
    %108 = vector.broadcast %cst_33 : f32 to vector<4x128xf32>
    %109 = arith.select %105, %107, %108 : vector<4x128xi1>, vector<4x128xf32>
    %110 = arith.addf %103, %109 : vector<4x128xf32>
    %c2_i32_34 = arith.constant 2 : i32
    %111 = vector.broadcast %c2_i32_34 : i32 to vector<4x128xi32>
    %112 = arith.cmpi eq, %97, %111 : vector<4x128xi32>
    %cst_35 = arith.constant 0.000000e+00 : f32
    %113 = vector.shape_cast %94 : vector<1x128xf32> to vector<1x128xf32>
    %114 = vector.broadcast %113 : vector<1x128xf32> to vector<4x128xf32>
    %115 = vector.broadcast %cst_35 : f32 to vector<4x128xf32>
    %116 = arith.select %112, %114, %115 : vector<4x128xi1>, vector<4x128xf32>
    %117 = arith.addf %110, %116 : vector<4x128xf32>
    %c3_i32_36 = arith.constant 3 : i32
    %118 = vector.broadcast %c3_i32_36 : i32 to vector<4x128xi32>
    %119 = arith.cmpi eq, %97, %118 : vector<4x128xi32>
    %cst_37 = arith.constant 0.000000e+00 : f32
    %120 = vector.shape_cast %96 : vector<1x128xf32> to vector<1x128xf32>
    %121 = vector.broadcast %120 : vector<1x128xf32> to vector<4x128xf32>
    %122 = vector.broadcast %cst_37 : f32 to vector<4x128xf32>
    %123 = arith.select %119, %121, %122 : vector<4x128xi1>, vector<4x128xf32>
    %124 = arith.addf %117, %123 : vector<4x128xf32>
    %125 = vector.shape_cast %124 : vector<4x128xf32> to vector<1x4x128xf32>
    %c0_38 = arith.constant 0 : index
    %c0_39 = arith.constant 0 : index
    %c0_40 = arith.constant 0 : index
    %126 = vector.load %arg4[%c0_38, %c0_39, %c0_40] : memref<1x4x128xf32, #tpu.memory_space<vmem>>, vector<1x4x128xf32>
    tpu.vector_store %arg4[%c0_38, %c0_39, %c0_40], %125 {strides = array<i32>} : memref<1x4x128xf32, #tpu.memory_space<vmem>>, vector<1x4x128xf32>,
    return
  }
  func.func @transform_0(%arg0: i32) -> (i32, i32) {
    %c0_i32 = arith.constant 0 : i32
    %c0_i32_0 = arith.constant 0 : i32
    return %arg0, %c0_i32 : i32, i32
  }
  func.func @transform_1(%arg0: i32) -> (i32, i32) {
    %c0_i32 = arith.constant 0 : i32
    %c0_i32_0 = arith.constant 0 : i32
    return %arg0, %c0_i32 : i32, i32
  }
  func.func @transform_2(%arg0: i32) -> (i32, i32) {
    %c0_i32 = arith.constant 0 : i32
    %c0_i32_0 = arith.constant 0 : i32
    %c0_i32_1 = arith.constant 0 : i32
    return %c0_i32, %c0_i32_0 : i32, i32
  }
  func.func @transform_3(%arg0: i32) -> (i32, i32, i32) {
    %c0_i32 = arith.constant 0 : i32
    %c0_i32_0 = arith.constant 0 : i32
    %c0_i32_1 = arith.constant 0 : i32
    return %arg0, %c0_i32, %c0_i32_0 : i32, i32, i32
  }
}

</mosaic_0001>

<llo_original>
// kernel: tpu_custom_call.1
$region0: #{tpu_custom_call.1}
  #allocation0 [shape = 'u32[]', space=smem, size = 0x4, offset = 0x4, fixed_abs, tag = 'smem constant byte address 0x4 - core index']
  #allocation1 [shape = 'u32[144,128]{1,0:T(1,128)}', space=vmem, size = 0x12000, scoped, tag = 'internal scratch']
  %s0 = inlined_call_operand.hbm [shape: f32[8,128], index: 0, kind: input, shape index: {}]
  %s1 = inlined_call_operand.vmem [shape: s8[8,128], index: 1, kind: input, shape index: {}]
  %s2 = inlined_call_operand.vmem [shape: f32[1,128], index: 2, kind: input, shape index: {}]
  %s3 = inlined_call_operand.hbm [shape: f32[1,4,128], index: 3, kind: output, shape index: {}]
  %s4 = sld [smem:[#allocation0]]
  $region26: #{tpu_custom_call.1} parent=0
    _
  %s6 = ssub.s32 1, %s4
  %s7 = scalar_select 0, %s6, %s4
  $region1: #{tpu_custom_call.1} parent=0
    #allocation2 [shape = 'u8[4096]{0}', space=vmem, size = 0x1000, scoped, tag = 'input window, operand 0, single buffered']
    #allocation3 [shape = 's32[1]{0}', space=sflag, size = 0x4, scoped, tag = 'scoped memory for tpu_custom_call.1']
    #allocation4 [shape = 's32[1]{0}', space=sflag, size = 0x4, scoped, tag = 'scoped memory for tpu_custom_call.1']
    #allocation5 [shape = 'u8[2048]{0}', space=vmem, size = 0x800, scoped, tag = 'output window, operand 0, single buffered']
    %8 = vsyncpa [#allocation3], 0
    %9 = vsyncpa [#allocation4], 0
    // Predicated region
    $region2: #{tpu_custom_call.1} parent=1 // pred_check
      _
    $region3: #{tpu_custom_call.1} parent=1 // pred_check_branch
      %11 = sbr.rel (0) target = $region5
    $region4: #{tpu_custom_call.1} parent=1 // pred_region
      %s13 = ssub.s32 128, 128
      %14 = vsyncadd [#allocation3], %s13
      %s16 = sshll.u32 [#allocation2], 4
      %s17 = int_to_ptr.vmem [resolvable:$true] %s16
      %19 = dma.hbm_to_vmem [thread:$0]  %s0, 128, %s17, [#allocation3]
    $region5: #{tpu_custom_call.1} parent=1 // pred_fallthru
      _
    // Predicated region
    $region6: #{tpu_custom_call.1} parent=1 // pred_check
      _
    $region7: #{tpu_custom_call.1} parent=1 // pred_check_branch
      %21 = sbr.rel (0) target = $region9
    $region8: #{tpu_custom_call.1} parent=1 // pred_region
      _
    $region9: #{tpu_custom_call.1} parent=1 // pred_fallthru
      _
    // Predicated region
    $region10: #{tpu_custom_call.1} parent=1 // pred_check
      _
    $region11: #{tpu_custom_call.1} parent=1 // pred_check_branch
      %23 = sbr.rel (0) target = $region13
    $region12: #{tpu_custom_call.1} parent=1 // pred_region
      _
    $region13: #{tpu_custom_call.1} parent=1 // pred_fallthru
      _
    // Predicated region
    $region14: #{tpu_custom_call.1} parent=1 // pred_check
      _
    $region15: #{tpu_custom_call.1} parent=1 // pred_check_branch
      %25 = sbr.rel (0) target = $region17
    $region16: #{tpu_custom_call.1} parent=1 // pred_region
      %26 = dma.done [#allocation3], 128
    $region17: #{tpu_custom_call.1} parent=1 // pred_fallthru
      _
    %v27 = vlaneseq
    %v28 = vand.u32 %v27, 127
    %s29 = smul.u32 0, 8
    %v30 = vlaneseq
    %v31 = vshrl.u32 %v30, 7
    %v32 = vstv %s29
    %v33 = vadd.s32 %v32, %v31
    %vm34 = vcmp.lt.s32.totalorder %v33, 8
    %v35 = vld [vmem:[#allocation2] sm:$0xff]
    %v36 = vsel %vm34, 1, 0
    %vm37 = vcmp.eq.s32.totalorder %v36, 1
    %v38 = vsel %vm37, %v35, 0.0
    %v39 = vld [vmem:[%s1] sm:$0x3]
    %v40 = vunpack.c.0.s8 %v39
    %v41 = vcvt.s32.f32 %v40
    %v42 = vsel %vm37, %v41, 0.0
    %43 = vrot.lane.b32.xlu0 %v38, 127
    %v44 = vpop.permute.xlu0 %43
    %45 = vrot.lane.b32.xlu0 %v38, 1
    %v46 = vpop.permute.xlu0 %45
    %v47 = vand.u32 %v28, 1
    %vm48 = vcmp.eq.s32.totalorder %v47, 0
    %v49 = vsel %vm48, 1, 0
    %vm50 = vcmp.eq.s32.totalorder %v49, 1
    %v51 = vsel %vm50, %v44, %v46
    %v52 = vmax.f32 %v38, %v51
    %53 = vrot.lane.b32.xlu0 %v52, 126
    %v54 = vpop.permute.xlu0 %53
    %55 = vrot.lane.b32.xlu0 %v52, 2
    %v56 = vpop.permute.xlu0 %55
    %v57 = vshra.s32 %v28, 1
    %v58 = vand.u32 %v57, 1
    %vm59 = vcmp.eq.s32.totalorder %v58, 0
    %v60 = vsel %vm59, 1, 0
    %vm61 = vcmp.eq.s32.totalorder %v60, 1
    %v62 = vsel %vm61, %v54, %v56
    %v63 = vmax.f32 %v52, %v62
    %v64 = vsub.f32 %v38, %v63
    %v65 = vmul.f32 %v64, 1.442695
    %v66 = vpow.pop %v65
    %67 = vrot.lane.b32.xlu0 %v66, 127
    %v68 = vpop.permute.xlu0 %67
    %69 = vrot.lane.b32.xlu0 %v66, 1
    %v70 = vpop.permute.xlu0 %69
    %v71 = vsel %vm50, %v68, %v70
    %v72 = vadd.f32 %v66, %v71
    %73 = vrot.lane.b32.xlu0 %v72, 126
    %v74 = vpop.permute.xlu0 %73
    %75 = vrot.lane.b32.xlu0 %v72, 2
    %v76 = vpop.permute.xlu0 %75
    %v77 = vsel %vm61, %v74, %v76
    %v78 = vadd.f32 %v72, %v77
    %v79 = vlog2.pop %v78
    %v80 = vmul.f32 %v79, 0.6931472
    %v81 = vld [vmem:[%s2] sm:$0x1]
    %v83 = vlaneseq
    %v84 = vshrl.u32 %v83, 7
    %v85 = vsub.s32 0, %v84
    %v86 = vrot.slane %v81, %v85
    %v88 = vmul.f32 %v42, %v86
    %v89 = vand.u32 %v28, 3
    %vm90 = vcmp.eq.s32.totalorder %v89, 1
    %v91 = vmul.f32 %v78, 0.15
    %vm92 = vcmp.gt.f32.partialorder %v66, %v91
    %v93 = vsub.f32 %v80, %v64
    %v94 = vmul.f32 %v88, %v93
    %v95 = vsel %vm90, 1, 0
    %vm96 = vcmp.eq.s32.totalorder %v95, 1
    %vm97 = vmand %vm96, %vm92
    %v98 = vsel %vm97, %v42, 0.0
    %v99 = vsel %vm96, %v42, 0.0
    %v100 = vrot.slane %v94, 4
    %v101 = vadd.f32 %v94, %v100
    %v102 = vrot.slane %v101, 2
    %v103 = vadd.f32 %v101, %v102
    %v104 = vrot.slane %v103, 1
    %v105 = vadd.f32 %v103, %v104
    %v106 = vrot.slane %v88, 4
    %v107 = vadd.f32 %v88, %v106
    %v108 = vrot.slane %v107, 2
    %v109 = vadd.f32 %v107, %v108
    %v110 = vrot.slane %v109, 1
    %v111 = vadd.f32 %v109, %v110
    %v112 = vrot.slane %v98, 4
    %v113 = vadd.f32 %v98, %v112
    %v114 = vrot.slane %v113, 2
    %v115 = vadd.f32 %v113, %v114
    %v116 = vrot.slane %v115, 1
    %v117 = vadd.f32 %v115, %v116
    %v118 = vrot.slane %v99, 4
    %v119 = vadd.f32 %v99, %v118
    %v120 = vrot.slane %v119, 2
    %v121 = vadd.f32 %v119, %v120
    %v122 = vrot.slane %v121, 1
    %v123 = vadd.f32 %v121, %v122
    %vm124 = vcmp.eq.s32.totalorder %v31, 0
    %v125 = vsel %vm124, %v105, 0.0
    %vm126 = vcmp.eq.s32.totalorder %v31, 1
    %v127 = vsel %vm126, %v111, 0.0
    %v128 = vadd.f32 %v125, %v127
    %vm129 = vcmp.eq.s32.totalorder %v31, 2
    %v130 = vsel %vm129, %v117, 0.0
    %v131 = vadd.f32 %v128, %v130
    %vm132 = vcmp.eq.s32.totalorder %v31, 3
    %v133 = vsel %vm132, %v123, 0.0
    %v134 = vadd.f32 %v131, %v133
    %135 = vst [vmem:[#allocation5] sm:$0xf] %v134
    // Predicated region
    $region18: #{tpu_custom_call.1} parent=1 // pred_check
      _
    $region19: #{tpu_custom_call.1} parent=1 // pred_check_branch
      %137 = sbr.rel (0) target = $region21
    $region20: #{tpu_custom_call.1} parent=1 // pred_region
      %s139 = ssub.s32 64, 64
      %140 = vsyncadd [#allocation4], %s139
      %s142 = sshll.u32 [#allocation5], 4
      %s143 = int_to_ptr.vmem [resolvable:$true] %s142
      %145 = dma.vmem_to_hbm [thread:$0]  %s143, 64, %s3, [#allocation4]
    $region21: #{tpu_custom_call.1} parent=1 // pred_fallthru
      _
    // Predicated region
    $region22: #{tpu_custom_call.1} parent=1 // pred_check
      _
    $region23: #{tpu_custom_call.1} parent=1 // pred_check_branch
      %147 = sbr.rel (0) target = $region25
    $region24: #{tpu_custom_call.1} parent=1 // pred_region
      %148 = dma.done [#allocation4], 64
    $region25: #{tpu_custom_call.1} parent=1 // pred_fallthru
      _
    %149 = vsyncpa [#allocation3], 1
    %150 = vsyncpa [#allocation4], 1

</llo_original>
